<compile_context>
chip_gen: v6e
topology: v6e:2x2x1
jax: 0.10.0
libtpu: 0.0.40
codegen_flags: <defaults>
</compile_context>

<pallas_src>
import jax
import jax.numpy as jnp
from jax.experimental import pallas as pl
from jax.experimental.pallas import tpu as pltpu


def _mse_partial_kernel(off_ref, x_ref, t_ref, out_ref):
    """One grid step: sum of squared errors of this (Bt, Lt, Dp) block."""
    x = x_ref[...].astype(jnp.float32)      # (Bt, Lt, Dp)
    t = t_ref[...].astype(jnp.float32)      # (Bt, Lt, Dp)
    off = off_ref[...].astype(jnp.float32)  # (Bt, 1,  Dp)  - batch first-timestep row

    d = (x - off) - t                       # pure VPU, sublane-broadcast of off
    s = jnp.sum(d * d)                      # one block-local reduce (amortized over MiB-sized block)

    # Splat the scalar partial across the (8,128)-padded output tile so the
    # store is an unmasked lane/sublane-dense vst; wrapper reads element [0,0].
    out_ref[...] = jnp.zeros(out_ref.shape, jnp.float32) + s


def mean_squared_error_loss(x, target, base=None):
    """Forward pass of MeanSquaredErrorLoss. Returns a scalar f32 loss."""
    assert x.shape == target.shape, (x.shape, target.shape)
    B, L, D = x.shape
    n_total = B * L * D
    itemsize = x.dtype.itemsize

    # Offset row (B, 1, D). PyTorch: only subtracted when base is None
    # (offset = input[:,0:1,:] - zeros); when base is given, nothing is subtracted.
    if base is None:
        offset = x[:, 0:1, :]
    else:
        offset = jnp.zeros((B, 1, D), dtype=x.dtype)

    # ---- Lane-densify: make the last dim a multiple of 128 when cheap. ----
    if D % 128 == 0:
        xd, td, offd, Lp, Dp = x, target, offset, L, D
    elif 128 % D == 0 and (L * D) % 128 == 0:
        rep = 128 // D
        Lp, Dp = (L * D) // 128, 128
        xd = x.reshape(B, Lp, Dp)            # contiguous reshape: free
        td = target.reshape(B, Lp, Dp)
        offd = jnp.tile(offset, (1, 1, rep))  # (B, 1, 128); index j -> offset[j % D]
    else:
        # Awkward D (neither multiple nor divisor of 128): keep original layout.
        xd, td, offd, Lp, Dp = x, target, offset, L, D

    # ---- Tile selection: ~4 MiB per input block, clean divisors only. ----
    budget = 4 * 1024 * 1024
    sub_mult = {4: 8, 2: 16, 1: 32}.get(itemsize, 8)   # sublane multiple per dtype
    row_bytes = Lp * Dp * itemsize

    if row_bytes <= budget:
        Lt = Lp                               # full sequence per block
        Bt = 1
        for c in range(1, B + 1):             # largest batch divisor that fits
            if B % c == 0 and c * row_bytes <= budget:
                Bt = c
    else:
        Bt = 1
        Lt = Lp                               # fallback: full extent (always legal)
        max_rows = budget // (Dp * itemsize)
        for c in range(sub_mult, min(Lp, max_rows) + 1, sub_mult):
            if Lp % c == 0:
                Lt = c                        # largest sublane-aligned divisor that fits

    nB, nL = B // Bt, Lp // Lt
    block_bytes = Bt * Lt * Dp * itemsize

    # VMEM budget: 2 inputs x 2 pipeline buffers x block + offset + out tiles + slack.
    need = 4 * block_bytes + 2 * Bt * Dp * itemsize + 2 * (8 * 128 * 4) + (2 << 20)
    vmem_limit = int(max(32 * 1024 * 1024, need))

    partials = pl.pallas_call(
        _mse_partial_kernel,
        out_shape=jax.ShapeDtypeStruct((nB, nL, 8, 128), jnp.float32),
        grid_spec=pltpu.PrefetchScalarGridSpec(
            num_scalar_prefetch=0,
            grid=(nB, nL),
            in_specs=[
                pl.BlockSpec((Bt, 1, Dp), lambda b, l: (b, 0, 0)),   # offset row
                pl.BlockSpec((Bt, Lt, Dp), lambda b, l: (b, l, 0)),  # input
                pl.BlockSpec((Bt, Lt, Dp), lambda b, l: (b, l, 0)),  # target
            ],
            out_specs=pl.BlockSpec((1, 1, 8, 128), lambda b, l: (b, l, 0, 0)),
        ),
        compiler_params=pltpu.CompilerParams(
            dimension_semantics=("parallel", "parallel"),
            vmem_limit_bytes=vmem_limit,
        ),
        cost_estimate=pl.CostEstimate(
            flops=4 * n_total,
            transcendentals=0,
            bytes_accessed=(2 * n_total + B * D) * itemsize + nB * nL * 8 * 128 * 4,
        ),
    )(offd, xd, td)

    # Final tiny reduction + normalization in the wrapper (keeps all grid axes parallel).
    return jnp.sum(partials[:, :, 0, 0]) / n_total


def _reference(x, target, base=None):
    xf = x.astype(jnp.float32)
    tf = target.astype(jnp.float32)
    if base is None:
        xf = xf - xf[:, 0:1, :]
    return jnp.mean((xf - tf) ** 2)


if __name__ == "__main__":
    key = jax.random.PRNGKey(0)

    # Test 1: the module's nominal small shape [batch, length, dim] with D < 128
    # (exercises the lane-densify path).
    B, L, D = 2, 8, 32
    k1, k2, k3, k4 = jax.random.split(key, 4)
    x = jax.random.normal(k1, (B, L, D), dtype=jnp.float32)
    target = jax.random.normal(k2, (B, L, D), dtype=jnp.float32)

    loss = mean_squared_error_loss(x, target)
    jax.block_until_ready(loss)
    ref = _reference(x, target)
    assert jnp.allclose(loss, ref, rtol=1e-5, atol=1e-6), (loss, ref)

    # Test 2: larger shape that exercises multi-block grid (batch tiles and
    # L-tiles, offset row pinned across L-tiles).
    B2, L2, D2 = 2, 4096, 512
    x2 = jax.random.normal(k3, (B2, L2, D2), dtype=jnp.float32)
    t2 = jax.random.normal(k4, (B2, L2, D2), dtype=jnp.float32)

    loss2 = mean_squared_error_loss(x2, t2)
    jax.block_until_ready(loss2)
    ref2 = _reference(x2, t2)
    assert jnp.allclose(loss2, ref2, rtol=1e-4, atol=1e-6), (loss2, ref2)

    print("KERNEL_OK")
</pallas_src>

<mosaic_0001>
module attributes {stable_mosaic.version = 11 : i64} {
  func.func @_mse_partial_kernel(%arg0: i32, %arg1: i32, %arg2: memref<2x1x128xf32, #tpu.memory_space<vmem>>, %arg3: memref<2x2x128xf32, #tpu.memory_space<vmem>>, %arg4: memref<2x2x128xf32, #tpu.memory_space<vmem>>, %arg5: memref<1x1x8x128xf32, #tpu.memory_space<vmem>>) attributes {dimension_semantics = [#tpu.dimension_semantics<parallel>, #tpu.dimension_semantics<parallel>], iteration_bounds = array<i64: 1, 1>, scalar_prefetch = 0 : i64, scratch_operands = 0 : i64, tpu.core_type = #tpu.core_type<tc>, window_params = [{transform_indices = @transform_0, window_bounds = array<i64: 2, 1, 128>}, {transform_indices = @transform_1, window_bounds = array<i64: 2, 2, 128>}, {transform_indices = @transform_2, window_bounds = array<i64: 2, 2, 128>}, {transform_indices = @transform_3, window_bounds = array<i64: 1, 1, 8, 128>}]} {
    %c0 = arith.constant 0 : index
    %c0_0 = arith.constant 0 : index
    %c0_1 = arith.constant 0 : index
    %0 = vector.load %arg3[%c0, %c0_0, %c0_1] : memref<2x2x128xf32, #tpu.memory_space<vmem>>, vector<2x2x128xf32>
    %c0_2 = arith.constant 0 : index
    %c0_3 = arith.constant 0 : index
    %c0_4 = arith.constant 0 : index
    %1 = vector.load %arg4[%c0_2, %c0_3, %c0_4] : memref<2x2x128xf32, #tpu.memory_space<vmem>>, vector<2x2x128xf32>
    %c0_5 = arith.constant 0 : index
    %c0_6 = arith.constant 0 : index
    %c0_7 = arith.constant 0 : index
    %2 = vector.load %arg2[%c0_5, %c0_6, %c0_7] : memref<2x1x128xf32, #tpu.memory_space<vmem>>, vector<2x1x128xf32>
    %3 = vector.broadcast %2 : vector<2x1x128xf32> to vector<2x2x128xf32>
    %4 = arith.subf %0, %3 : vector<2x2x128xf32>
    %5 = arith.subf %4, %1 : vector<2x2x128xf32>
    %6 = arith.mulf %5, %5 : vector<2x2x128xf32>
    %7 = vector.shape_cast %6 : vector<2x2x128xf32> to vector<1x2x2x128xf32>
    %cst = arith.constant dense<0.000000e+00> : vector<1xf32>
    %8 = vector.multi_reduction <add>, %7, %cst [1, 2, 3] : vector<1x2x2x128xf32> to vector<1xf32>
    %9 = vector.shape_cast %8 : vector<1xf32> to vector<1x1x1x1xf32>
    %10 = vector.extract %9[0, 0, 0, 0] : f32 from vector<1x1x1x1xf32>
    %cst_8 = arith.constant 0.000000e+00 : f32
    %11 = vector.broadcast %cst_8 : f32 to vector<1x1x8x128xf32>
    %12 = vector.broadcast %10 : f32 to vector<1x1x8x128xf32>
    %13 = arith.addf %11, %12 : vector<1x1x8x128xf32>
    %c0_9 = arith.constant 0 : index
    %c0_10 = arith.constant 0 : index
    %c0_11 = arith.constant 0 : index
    %c0_12 = arith.constant 0 : index
    %14 = vector.load %arg5[%c0_9, %c0_10, %c0_11, %c0_12] : memref<1x1x8x128xf32, #tpu.memory_space<vmem>>, vector<1x1x8x128xf32>
    tpu.vector_store %arg5[%c0_9, %c0_10, %c0_11, %c0_12], %13 {strides = array<i32>} : memref<1x1x8x128xf32, #tpu.memory_space<vmem>>, vector<1x1x8x128xf32>,
    return
  }
  func.func @transform_0(%arg0: i32, %arg1: i32) -> (i32, i32, i32) {
    %c0_i32 = arith.constant 0 : i32
    %c0_i32_0 = arith.constant 0 : i32
    %c0_i32_1 = arith.constant 0 : i32
    return %arg0, %c0_i32, %c0_i32_0 : i32, i32, i32
  }
  func.func @transform_1(%arg0: i32, %arg1: i32) -> (i32, i32, i32) {
    %c0_i32 = arith.constant 0 : i32
    %c0_i32_0 = arith.constant 0 : i32
    return %arg0, %arg1, %c0_i32 : i32, i32, i32
  }
  func.func @transform_2(%arg0: i32, %arg1: i32) -> (i32, i32, i32) {
    %c0_i32 = arith.constant 0 : i32
    %c0_i32_0 = arith.constant 0 : i32
    return %arg0, %arg1, %c0_i32 : i32, i32, i32
  }
  func.func @transform_3(%arg0: i32, %arg1: i32) -> (i32, i32, i32, i32) {
    %c0_i32 = arith.constant 0 : i32
    %c0_i32_0 = arith.constant 0 : i32
    %c0_i32_1 = arith.constant 0 : i32
    return %arg0, %arg1, %c0_i32, %c0_i32_0 : i32, i32, i32, i32
  }
}

</mosaic_0001>

<llo_original>
// kernel: tpu_custom_call.1
$region0: #{tpu_custom_call.1}
  #allocation0 [shape = 'u32[]', space=smem, size = 0x4, offset = 0x4, fixed_abs, tag = 'smem constant byte address 0x4 - core index']
  #allocation1 [shape = 'u32[144,128]{1,0:T(1,128)}', space=vmem, size = 0x12000, scoped, tag = 'internal scratch']
  %s0 = inlined_call_operand.hbm [shape: f32[2,1,128], index: 0, kind: input, shape index: {}]
  %s1 = inlined_call_operand.hbm [shape: f32[2,2,128], index: 1, kind: input, shape index: {}]
  %s2 = inlined_call_operand.hbm [shape: f32[2,2,128], index: 2, kind: input, shape index: {}]
  %s3 = inlined_call_operand.hbm [shape: f32[1,1,8,128], index: 3, kind: output, shape index: {}]
  %s4 = sld [smem:[#allocation0]]
  $region34: #{tpu_custom_call.1} parent=0
    _
  %s6 = ssub.s32 1, %s4
  %s7 = scalar_select 0, %s6, %s4
  $region1: #{tpu_custom_call.1} parent=0
    #allocation2 [shape = 'u8[1024]{0}', space=vmem, size = 0x400, scoped, tag = 'input window, operand 0, single buffered']
    #allocation3 [shape = 's32[1]{0}', space=sflag, size = 0x4, scoped, tag = 'scoped memory for tpu_custom_call.1']
    #allocation4 [shape = 's32[1]{0}', space=sflag, size = 0x4, scoped, tag = 'scoped memory for tpu_custom_call.1']
    #allocation5 [shape = 'u8[2048]{0}', space=vmem, size = 0x800, scoped, tag = 'input window, operand 1, single buffered']
    #allocation6 [shape = 's32[1]{0}', space=sflag, size = 0x4, scoped, tag = 'scoped memory for tpu_custom_call.1']
    #allocation7 [shape = 'u8[2048]{0}', space=vmem, size = 0x800, scoped, tag = 'input window, operand 2, single buffered']
    #allocation8 [shape = 'u8[4096]{0}', space=vmem, size = 0x1000, scoped, tag = 'output window, operand 0, single buffered']
    %8 = vsyncpa [#allocation3], 0
    %9 = vsyncpa [#allocation6], 0
    %10 = vsyncpa [#allocation4], 0
    // Predicated region
    $region2: #{tpu_custom_call.1} parent=1 // pred_check
      _
    $region3: #{tpu_custom_call.1} parent=1 // pred_check_branch
      %12 = sbr.rel (0) target = $region5
    $region4: #{tpu_custom_call.1} parent=1 // pred_region
      %s14 = ssub.s32 32, 32
      %15 = vsyncadd [#allocation3], %s14
      %s16 = sshll.u32 [#allocation2], 4
      %s17 = int_to_ptr.vmem [resolvable:$true] %s16
      %22 = dma.hbm_to_vmem [thread:$0]  %s0, 32, %s17, [#allocation3], 16, 16, 1
    $region5: #{tpu_custom_call.1} parent=1 // pred_fallthru
      _
    // Predicated region
    $region6: #{tpu_custom_call.1} parent=1 // pred_check
      _
    $region7: #{tpu_custom_call.1} parent=1 // pred_check_branch
      %24 = sbr.rel (0) target = $region9
    $region8: #{tpu_custom_call.1} parent=1 // pred_region
      %s26 = ssub.s32 64, 64
      %27 = vsyncadd [#allocation6], %s26
      %s28 = sshll.u32 [#allocation5], 4
      %s29 = int_to_ptr.vmem [resolvable:$true] %s28
      %34 = dma.hbm_to_vmem [thread:$0]  %s1, 64, %s29, [#allocation6], 32, 32, 2
    $region9: #{tpu_custom_call.1} parent=1 // pred_fallthru
      _
    // Predicated region
    $region10: #{tpu_custom_call.1} parent=1 // pred_check
      _
    $region11: #{tpu_custom_call.1} parent=1 // pred_check_branch
      %36 = sbr.rel (0) target = $region13
    $region12: #{tpu_custom_call.1} parent=1 // pred_region
      %s38 = ssub.s32 64, 64
      %39 = vsyncadd [#allocation6], %s38
      %s40 = sshll.u32 [#allocation7], 4
      %s41 = int_to_ptr.vmem [resolvable:$true] %s40
      %46 = dma.hbm_to_vmem [thread:$0]  %s2, 64, %s41, [#allocation6], 32, 32, 2
    $region13: #{tpu_custom_call.1} parent=1 // pred_fallthru
      _
    // Predicated region
    $region14: #{tpu_custom_call.1} parent=1 // pred_check
      _
    $region15: #{tpu_custom_call.1} parent=1 // pred_check_branch
      %48 = sbr.rel (0) target = $region17
    $region16: #{tpu_custom_call.1} parent=1 // pred_region
      %49 = dma.done [#allocation3], 32
    $region17: #{tpu_custom_call.1} parent=1 // pred_fallthru
      _
    // Predicated region
    $region18: #{tpu_custom_call.1} parent=1 // pred_check
      _
    $region19: #{tpu_custom_call.1} parent=1 // pred_check_branch
      %51 = sbr.rel (0) target = $region21
    $region20: #{tpu_custom_call.1} parent=1 // pred_region
      %52 = dma.done [#allocation6], 64
    $region21: #{tpu_custom_call.1} parent=1 // pred_fallthru
      _
    // Predicated region
    $region22: #{tpu_custom_call.1} parent=1 // pred_check
      _
    $region23: #{tpu_custom_call.1} parent=1 // pred_check_branch
      %54 = sbr.rel (0) target = $region25
    $region24: #{tpu_custom_call.1} parent=1 // pred_region
      %55 = dma.done [#allocation6], 64
    $region25: #{tpu_custom_call.1} parent=1 // pred_fallthru
      _
    %v56 = vld [vmem:[#allocation5] sm:$0x3]
    %v57 = vld [vmem:[#allocation5 + $0x2] sm:$0x3]
    %v58 = vld [vmem:[#allocation7] sm:$0x3]
    %v59 = vld [vmem:[#allocation7 + $0x2] sm:$0x3]
    %v60 = vld [vmem:[#allocation2] sm:$0x1]
    %v61 = vld [vmem:[#allocation2 + $0x1] sm:$0x1]
    %v64 = vlaneseq
    %v65 = vshrl.u32 %v64, 7
    %v66 = vsub.s32 0, %v65
    %v67 = vrot.slane %v60, %v66
    %v68 = vlaneseq
    %v69 = vshrl.u32 %v68, 7
    %v70 = vsub.s32 0, %v69
    %v71 = vrot.slane %v61, %v70
    %v74 = vsub.f32 %v56, %v67
    %v75 = vsub.f32 %v57, %v71
    %v76 = vsub.f32 %v74, %v58
    %v77 = vsub.f32 %v75, %v59
    %v78 = vmul.f32 %v76, %v76
    %v79 = vmul.f32 %v77, %v77
    %vm80 = vcmask 1041408
    %v81 = vsel %vm80, %v78, 0.0
    %v82 = vsel %vm80, %v79, 0.0
    %v83 = vadd.f32 %v81, %v82
    %84 = vadd.xlane.f32.xlu0 %v83
    %v85 = vpop.xlane.xlu0 %84
    %v86 = vrot.slane %v85, 4
    %v87 = vadd.f32 %v85, %v86
    %v88 = vrot.slane %v87, 2
    %v89 = vadd.f32 %v87, %v88
    %v90 = vrot.slane %v89, 1
    %v91 = vadd.f32 %v89, %v90
    %s92 = vtos %v91
    %v93 = vstv %s92
    %v94 = vadd.f32 %v93, 0.0
    %95 = vst [vmem:[#allocation8] sm:$0xff] %v94
    // Predicated region
    $region26: #{tpu_custom_call.1} parent=1 // pred_check
      _
    $region27: #{tpu_custom_call.1} parent=1 // pred_check_branch
      %97 = sbr.rel (0) target = $region29
    $region28: #{tpu_custom_call.1} parent=1 // pred_region
      %s99 = ssub.s32 128, 128
      %100 = vsyncadd [#allocation4], %s99
      %s102 = sshll.u32 [#allocation8], 4
      %s103 = int_to_ptr.vmem [resolvable:$true] %s102
      %105 = dma.vmem_to_hbm [thread:$0]  %s103, 128, %s3, [#allocation4]
    $region29: #{tpu_custom_call.1} parent=1 // pred_fallthru
      _
    // Predicated region
    $region30: #{tpu_custom_call.1} parent=1 // pred_check
      _
    $region31: #{tpu_custom_call.1} parent=1 // pred_check_branch
      %107 = sbr.rel (0) target = $region33
    $region32: #{tpu_custom_call.1} parent=1 // pred_region
      %108 = dma.done [#allocation4], 128
    $region33: #{tpu_custom_call.1} parent=1 // pred_fallthru
      _
    %109 = vsyncpa [#allocation3], 1
    %110 = vsyncpa [#allocation6], 1
    %111 = vsyncpa [#allocation4], 1

</llo_original>
